<compile_context>
chip_gen: v7x
topology: tpu7x:2x2x1
jax: 0.10.0
libtpu: 0.0.40
codegen_flags: <defaults>
</compile_context>

<pallas_src>
import functools
import math

import jax
import jax.numpy as jnp
from jax.experimental import pallas as pl
from jax.experimental.pallas import tpu as pltpu


# ------------------------------ helpers --------------------------------------
def _round_up(x, m):
    return (x + m - 1) // m * m


def _default_tile_cap():
    """Generation-aware row-tile cap: 512 on v5e, 1024 on v6e / v7x."""
    try:
        kind = jax.devices()[0].device_kind.lower()
    except Exception:  # pragma: no cover - defensive
        return 512
    if "v5" in kind:      # v5e / v5 lite (and v5p, harmlessly)
        return 512
    return 1024           # v6e, v7x, and newer


def _largest_divisor_mult8(n, cap):
    """Largest d <= cap with d % 8 == 0 and n % d == 0, or None."""
    k = min(cap, n) // 8
    while k >= 1:
        d = 8 * k
        if n % d == 0:
            return d
        k -= 1
    return None


# ----------------------------- Pallas kernel --------------------------------
def _soft_ce_kernel(x_ref, t_ref, out_ref, *, n_rows, mask_tail):
    """One grid step: a (t_rows, C) block of logits + soft targets.

    Writes the block's summed loss  sum_rows sum_c ( -target * log_softmax(x) )
    into a lane-dense (1, 8, 128) output block (all entries hold the same
    scalar; the wrapper reads [:, 0, 0]).  Tail rows past n_rows are masked
    only when `mask_tail` is True (decided at trace time).
    """
    x = x_ref[...].astype(jnp.float32)
    t = t_ref[...].astype(jnp.float32)

    # log_softmax(x) = x - logsumexp(x)  (numerically stable)
    m = jnp.max(x, axis=-1, keepdims=True)
    lse = m + jnp.log(jnp.sum(jnp.exp(x - m), axis=-1, keepdims=True))

    # per-row loss: sum_c -t * (x - lse) == lse * sum_c(t) - sum_c(t * x)
    # (exact even for unnormalized targets; avoids the full-tile (lse - x)
    #  subtract and the lane-broadcast of lse).
    t_sum = jnp.sum(t, axis=-1, keepdims=True)        # (t_rows, 1)
    tx_sum = jnp.sum(t * x, axis=-1, keepdims=True)   # (t_rows, 1)
    row_loss = lse * t_sum - tx_sum                    # (t_rows, 1)

    if mask_tail:
        # Mask rows of the ragged last block.  NOTE: garbage tail rows may
        # produce Inf/NaN in row_loss; jnp.where selects 0.0 for them and does
        # NOT propagate NaN from the unselected branch.  Do not replace this
        # with a multiply-by-mask.
        tile_rows = x.shape[0]
        rows = pl.program_id(0) * tile_rows + jax.lax.broadcasted_iota(
            jnp.int32, (tile_rows, 1), 0)
        row_loss = jnp.where(rows < n_rows, row_loss, 0.0)

    block_sum = jnp.sum(row_loss)
    out_ref[...] = jnp.zeros(out_ref.shape, jnp.float32) + block_sum


# ------------------------------ wrappers -------------------------------------
def soft_target_cross_entropy(x, target, *, tile_rows=None):
    """Pallas implementation of SoftTargetCrossEntropy.forward.

    x: (rows, classes), target: (n_target_rows, classes) with
    rows % n_target_rows == 0 (torch `target.repeat(...)` semantics).
    Returns a scalar f32 loss (mean over rows of x).
    Inputs may be f32 or bf16; the kernel upcasts to f32 in VMEM.
    """
    M, C = x.shape
    n = target.shape[0]
    assert M % n == 0, (
        "SoftTargetCrossEntropy: x rows must be an integer multiple of "
        f"target rows (got {M} vs {n})")

    # ---- row-tile selection (generation- and VMEM-aware) --------------------
    cap = tile_rows if tile_rows is not None else _default_tile_cap()
    # Keep 2 inputs x 2 buffers x t_rows x padded(C) x 4B under ~24 MiB.
    lanes = _round_up(C, 128)
    vmem_budget = 24 * 1024 * 1024
    cap = min(cap, max(8, (vmem_budget // (4 * 4 * lanes)) // 8 * 8))

    if M <= cap:
        if M >= 16:
            # Split small inputs into >= 2 blocks so both v7x TensorCores get
            # work via the "parallel" grid axis (costs one ~0.35us step on
            # single-TC chips; negligible).
            t_rows = min(_round_up(pl.cdiv(M, 2), 8), cap)
        else:
            t_rows = M            # block == full array dims (always legal)
    else:
        t_rows = cap

    # ---- target-repeat alignment (no O(M x C) HBM copy) ---------------------
    tgt = target
    if n != M and not (n % t_rows == 0 or t_rows % n == 0):
        d = _largest_divisor_mult8(n, t_rows)
        if d is not None:
            t_rows = d            # shrink tile so the modulo index_map applies
        else:
            # TODO(synk): no (8,*)-aligned tiling of the target period exists;
            # fall back to materializing the full repeat (extra HBM traffic).
            tgt = jnp.tile(target, (M // n, 1))
            n = M

    nblocks = pl.cdiv(M, t_rows)
    mask_tail = (M % t_rows) != 0

    x_spec = pl.BlockSpec((t_rows, C), lambda i: (i, 0))
    if n == M:
        tgt_spec = pl.BlockSpec((t_rows, C), lambda i: (i, 0))
    elif n % t_rows == 0:
        # Target spans an integer number of tiles: re-fetch via modulo index.
        nb = n // t_rows
        tgt_spec = pl.BlockSpec((t_rows, C), lambda i, _nb=nb: (i % _nb, 0))
    else:  # t_rows % n == 0
        # Target smaller than one tile: materialize exactly one tile's worth
        # (tiny) and reuse that block every step.
        tgt = jnp.tile(target, (t_rows // n, 1))
        tgt_spec = pl.BlockSpec((t_rows, C), lambda i: (0, 0))

    kernel = functools.partial(_soft_ce_kernel, n_rows=M, mask_tail=mask_tail)

    partials = pl.pallas_call(
        kernel,
        out_shape=jax.ShapeDtypeStruct((nblocks, 8, 128), jnp.float32),
        grid_spec=pltpu.PrefetchScalarGridSpec(
            num_scalar_prefetch=0,
            grid=(nblocks,),
            in_specs=[x_spec, tgt_spec],
            out_specs=pl.BlockSpec((1, 8, 128), lambda i: (i, 0, 0)),
        ),
        compiler_params=pltpu.CompilerParams(
            # Fully parallel row axis: each step writes its own partial-sum
            # block, so on v7x the two TensorCores split the row loop.
            dimension_semantics=("parallel",),
            # 2 inputs x 2 buffers x t_rows x padded(C) x 4B is kept <= 24 MiB
            # by the cap above; 32 MiB scoped limit leaves headroom and keeps
            # big tiles alive on v5e (16 MiB default scoped limit).
            vmem_limit_bytes=32 * 1024 * 1024,
        ),
    )(x, tgt)

    # Tiny final reduction over per-block partial sums (more accurate than a
    # serial scalar accumulator, and keeps the grid axis fully parallel).
    return jnp.sum(partials[:, 0, 0]) / M


def _soft_ce_xla(x, target):
    """Plain-XLA SoftTargetCrossEntropy for tiny inputs (cls head): a
    dedicated Pallas launch would be dominated by fixed overhead."""
    if target.shape[0] != x.shape[0]:
        target = jnp.tile(target, (x.shape[0] // target.shape[0], 1))
    xf = x.astype(jnp.float32)
    tf = target.astype(jnp.float32)
    return jnp.mean(jnp.sum(-tf * jax.nn.log_softmax(xf, axis=-1), axis=-1))


_CLS_XLA_ROW_THRESHOLD = 512


def _cls_head_loss(output, cls_target):
    if output.shape[0] < _CLS_XLA_ROW_THRESHOLD:
        return _soft_ce_xla(output, cls_target)
    return soft_target_cross_entropy(output, cls_target)


def make_token_label_cross_entropy(dense_weight=1.0, cls_weight=1.0,
                                   mixup_active=True, classes=1000,
                                   dynamic_dense_weight=False, epoch=310):
    """Replicates TokenLabelCrossEntropy.__init__ (scalar hyper-params only —
    this module has no learnable parameters)."""
    if dynamic_dense_weight and epoch <= 300:
        dense_weight = math.sqrt(epoch / 300) * dense_weight
    assert dense_weight + cls_weight > 0

    def forward(x, target):
        single_tl_training = False
        if isinstance(x, (tuple, list)) and len(x) == 2 and x[1].ndim == 3:
            output, aux_output = x
            B, N, C = aux_output.shape
            cls_target, aux_target = target
        elif isinstance(x, (tuple, list)) and len(x) == 2 and x[1].ndim == 2:
            output, aux_output = x
            B, C = aux_output.shape
            cls_target, aux_target = target
        else:
            aux_output = x
            B, N, C = aux_output.shape
            aux_target = target
            single_tl_training = True

        if single_tl_training:
            aux_output = jnp.mean(aux_output, axis=1)
            loss_aux = soft_target_cross_entropy(aux_output, aux_target)
            return dense_weight * loss_aux
        elif aux_output.ndim == 2:
            loss_aux = soft_target_cross_entropy(aux_output, aux_target)
            loss_cls = _cls_head_loss(output, cls_target)
        else:
            aux_target = aux_target.reshape(B * N, C)
            aux_output = aux_output.reshape(-1, C)
            loss_cls = _cls_head_loss(output, cls_target)
            loss_aux = soft_target_cross_entropy(aux_output, aux_target)
        return cls_weight * loss_cls + dense_weight * loss_aux

    return forward


# ------------------------------ reference ------------------------------------
def _ref_soft_ce(x, t):
    if t.shape[0] != x.shape[0]:
        t = jnp.tile(t, (x.shape[0] // t.shape[0], 1))
    return jnp.mean(jnp.sum(-t * jax.nn.log_softmax(x, axis=-1), axis=-1))


def _ref_token_label_ce(x, target, dense_weight=1.0, cls_weight=1.0):
    output, aux_output = x
    cls_target, aux_target = target
    B, N, C = aux_output.shape
    loss_cls = _ref_soft_ce(output, cls_target)
    loss_aux = _ref_soft_ce(aux_output.reshape(-1, C),
                            aux_target.reshape(B * N, C))
    return cls_weight * loss_cls + dense_weight * loss_aux


# --------------------------------- main --------------------------------------
if __name__ == "__main__":
    key = jax.random.PRNGKey(0)
    B, N, C = 2, 8, 128  # small stand-in for classes=1000

    k1, k2, k3, k4, k5, k6, k7, k8 = jax.random.split(key, 8)
    output = jax.random.normal(k1, (B, C), dtype=jnp.float32)         # cls logits
    aux_output = jax.random.normal(k2, (B, N, C), dtype=jnp.float32)  # token logits
    # soft (mixup-style) target distributions
    cls_target = jax.nn.softmax(jax.random.normal(k3, (B, C), dtype=jnp.float32), axis=-1)
    aux_target = jax.nn.softmax(jax.random.normal(k4, (B, N, C), dtype=jnp.float32), axis=-1)

    loss_fn = make_token_label_cross_entropy(dense_weight=1.0, cls_weight=1.0)
    loss = loss_fn((output, aux_output), (cls_target, aux_target))
    loss = jax.block_until_ready(loss)

    ref = _ref_token_label_ce((output, aux_output), (cls_target, aux_target))
    assert jnp.allclose(loss, ref, rtol=1e-5, atol=1e-5), (loss, ref)

    # Extra check 1: ragged tail (M not a multiple of the row tile) with a
    # non-128-multiple class dim -> exercises the in-kernel row mask path.
    xb = jax.random.normal(k5, (520, 130), dtype=jnp.float32)
    tb = jax.nn.softmax(jax.random.normal(k6, (520, 130), dtype=jnp.float32), axis=-1)
    lb = jax.block_until_ready(soft_target_cross_entropy(xb, tb))
    assert jnp.allclose(lb, _ref_soft_ce(xb, tb), rtol=1e-4, atol=1e-4), (lb,)

    # Extra check 2: target repeat expressed via the index_map modulo path.
    xc = jax.random.normal(k7, (2048, 32), dtype=jnp.float32)
    tc = jax.nn.softmax(jax.random.normal(k8, (1024, 32), dtype=jnp.float32), axis=-1)
    lc = jax.block_until_ready(soft_target_cross_entropy(xc, tc))
    assert jnp.allclose(lc, _ref_soft_ce(xc, tc), rtol=1e-4, atol=1e-4), (lc,)

    # Extra check 3: bf16 inputs (halved HBM traffic path), in-kernel upcast.
    xd = jax.random.normal(k5, (272, 128), dtype=jnp.bfloat16)
    td = jax.nn.softmax(jax.random.normal(k6, (272, 128), dtype=jnp.float32),
                        axis=-1).astype(jnp.bfloat16)
    ld = jax.block_until_ready(soft_target_cross_entropy(xd, td))
    assert jnp.allclose(ld, _ref_soft_ce(xd.astype(jnp.float32),
                                         td.astype(jnp.float32)),
                        rtol=2e-2, atol=2e-2), (ld,)

    print("KERNEL_OK")
</pallas_src>

<mosaic_0001>
module attributes {stable_mosaic.version = 11 : i64} {
  func.func @_soft_ce_kernel(%arg0: i32, %arg1: memref<8x128xf32, #tpu.memory_space<vmem>>, %arg2: memref<8x128xf32, #tpu.memory_space<vmem>>, %arg3: memref<1x8x128xf32, #tpu.memory_space<vmem>>) attributes {dimension_semantics = [#tpu.dimension_semantics<parallel>], iteration_bounds = array<i64: 2>, scalar_prefetch = 0 : i64, scratch_operands = 0 : i64, tpu.core_type = #tpu.core_type<tc>, window_params = [{transform_indices = @transform_0, window_bounds = array<i64: 8, 128>}, {transform_indices = @transform_1, window_bounds = array<i64: 8, 128>}, {transform_indices = @transform_2, window_bounds = array<i64: 1, 8, 128>}]} {
    %c0 = arith.constant 0 : index
    %c0_0 = arith.constant 0 : index
    %0 = vector.load %arg1[%c0, %c0_0] : memref<8x128xf32, #tpu.memory_space<vmem>>, vector<8x128xf32>
    %c0_1 = arith.constant 0 : index
    %c0_2 = arith.constant 0 : index
    %1 = vector.load %arg2[%c0_1, %c0_2] : memref<8x128xf32, #tpu.memory_space<vmem>>, vector<8x128xf32>
    %cst = arith.constant dense<0xFF800000> : vector<8xf32>
    %2 = vector.multi_reduction <maximumf>, %0, %cst [1] : vector<8x128xf32> to vector<8xf32>
    %3 = vector.shape_cast %2 : vector<8xf32> to vector<8x1xf32>
    %4 = vector.broadcast %3 : vector<8x1xf32> to vector<8x128xf32>
    %5 = arith.subf %0, %4 : vector<8x128xf32>
    %6 = math.exp %5 : vector<8x128xf32>
    %cst_3 = arith.constant dense<0.000000e+00> : vector<8xf32>
    %7 = vector.multi_reduction <add>, %6, %cst_3 [1] : vector<8x128xf32> to vector<8xf32>
    %8 = vector.shape_cast %7 : vector<8xf32> to vector<8x1xf32>
    %9 = math.log %8 : vector<8x1xf32>
    %10 = arith.addf %3, %9 : vector<8x1xf32>
    %cst_4 = arith.constant dense<0.000000e+00> : vector<8xf32>
    %11 = vector.multi_reduction <add>, %1, %cst_4 [1] : vector<8x128xf32> to vector<8xf32>
    %12 = vector.shape_cast %11 : vector<8xf32> to vector<8x1xf32>
    %13 = arith.mulf %1, %0 : vector<8x128xf32>
    %cst_5 = arith.constant dense<0.000000e+00> : vector<8xf32>
    %14 = vector.multi_reduction <add>, %13, %cst_5 [1] : vector<8x128xf32> to vector<8xf32>
    %15 = vector.shape_cast %14 : vector<8xf32> to vector<8x1xf32>
    %16 = arith.mulf %10, %12 : vector<8x1xf32>
    %17 = arith.subf %16, %15 : vector<8x1xf32>
    %18 = vector.shape_cast %17 : vector<8x1xf32> to vector<1x8x1xf32>
    %cst_6 = arith.constant dense<0.000000e+00> : vector<1xf32>
    %19 = vector.multi_reduction <add>, %18, %cst_6 [1, 2] : vector<1x8x1xf32> to vector<1xf32>
    %20 = vector.shape_cast %19 : vector<1xf32> to vector<1x1x1xf32>
    %21 = vector.extract %20[0, 0, 0] : f32 from vector<1x1x1xf32>
    %cst_7 = arith.constant 0.000000e+00 : f32
    %22 = vector.broadcast %cst_7 : f32 to vector<1x8x128xf32>
    %23 = vector.broadcast %21 : f32 to vector<1x8x128xf32>
    %24 = arith.addf %22, %23 : vector<1x8x128xf32>
    %c0_8 = arith.constant 0 : index
    %c0_9 = arith.constant 0 : index
    %c0_10 = arith.constant 0 : index
    %25 = vector.load %arg3[%c0_8, %c0_9, %c0_10] : memref<1x8x128xf32, #tpu.memory_space<vmem>>, vector<1x8x128xf32>
    tpu.vector_store %arg3[%c0_8, %c0_9, %c0_10], %24 {strides = array<i32>} : memref<1x8x128xf32, #tpu.memory_space<vmem>>, vector<1x8x128xf32>,
    return
  }
  func.func @transform_0(%arg0: i32) -> (i32, i32) {
    %c0_i32 = arith.constant 0 : i32
    %c0_i32_0 = arith.constant 0 : i32
    return %arg0, %c0_i32 : i32, i32
  }
  func.func @transform_1(%arg0: i32) -> (i32, i32) {
    %c0_i32 = arith.constant 0 : i32
    %c0_i32_0 = arith.constant 0 : i32
    return %arg0, %c0_i32 : i32, i32
  }
  func.func @transform_2(%arg0: i32) -> (i32, i32, i32) {
    %c0_i32 = arith.constant 0 : i32
    %c0_i32_0 = arith.constant 0 : i32
    %c0_i32_1 = arith.constant 0 : i32
    return %arg0, %c0_i32, %c0_i32_0 : i32, i32, i32
  }
}

</mosaic_0001>

<llo_original>
// kernel: tpu_custom_call.1
$region0: #{tpu_custom_call.1}
  #allocation0 [shape = 'u32[]', space=smem, size = 0x4, offset = 0x4, fixed_abs, tag = 'smem constant byte address 0x4 - core index']
  #allocation1 [shape = 'u32[144,128]{1,0:T(1,128)}', space=vmem, size = 0x12000, scoped, tag = 'internal scratch']
  %s0 = inlined_call_operand.hbm [shape: f32[16,128], index: 0, kind: input, shape index: {}]
  %s1 = inlined_call_operand.hbm [shape: f32[16,128], index: 1, kind: input, shape index: {}]
  %s2 = inlined_call_operand.hbm [shape: f32[2,8,128], index: 2, kind: output, shape index: {}]
  %s3 = sld [smem:[#allocation0]]
  $region49: #{tpu_custom_call.1} parent=0
    _
  %s5 = ssub.s32 1, %s3
  %s6 = scalar_select 0, %s5, %s3
  $region1: #{tpu_custom_call.1} parent=0
    #allocation2 [shape = 'u8[8192]{0}', space=vmem, size = 0x2000, scoped, tag = 'input window, operand 0']
    #allocation3 [shape = 's32[2]{0}', space=sflag, size = 0x8, scoped, tag = 'scoped memory for tpu_custom_call.1']
    #allocation4 [shape = 's32[2]{0}', space=sflag, size = 0x8, scoped, tag = 'scoped memory for tpu_custom_call.1']
    #allocation5 [shape = 'u8[8192]{0}', space=vmem, size = 0x2000, scoped, tag = 'input window, operand 1']
    #allocation6 [shape = 's32[2]{0}', space=sflag, size = 0x8, scoped, tag = 'scoped memory for tpu_custom_call.1']
    #allocation7 [shape = 'u8[8192]{0}', space=vmem, size = 0x2000, scoped, tag = 'output window, operand 0']
    %7 = vsyncpa [#allocation3], 0
    %s8 = scalar_lea.sflag [#allocation3], 1
    %9 = vsyncpa %s8, 0
    %10 = vsyncpa [#allocation6], 0
    %s11 = scalar_lea.sflag [#allocation6], 1
    %12 = vsyncpa %s11, 0
    %13 = vsyncpa [#allocation4], 0
    %s14 = scalar_lea.sflag [#allocation4], 1
    %15 = vsyncpa %s14, 0
    loop: start=0, step=1, limit=4
    $region2: #{tpu_custom_call.1} parent=1 // loop_pre_header
      _
    $region3: #{tpu_custom_call.1} parent=1 // loop_header
      %s17 = sphi 0, %s21
      %p18 = scmp.ge.s32.totalorder %s17, 4
      %s27 = sphi 0, %s29
      %s30 = sphi 0, %s27
      %s31 = sphi 0, %s30
      %s47 = sphi 0, %s31
      %s53 = sphi 0, %s55
      %s56 = sphi 0, %s53
      %s57 = sphi 0, %s56
      %s73 = sphi 0, %s57
      %s79 = sphi 0, %s81
      %s82 = sphi 0, %s79
      %s83 = sphi 0, %s82
      %s99 = sphi 0, %s83
    $region4: #{tpu_custom_call.1} parent=1 // loop_header_branch
      %20 = sbr.rel (%p18) target = $region8
    $region5: #{tpu_custom_call.1} parent=1 // loop_body
      %s22 = ssub.s32 %s17, 1
      %s23 = ssub.s32 %s17, 2
      %s24 = sadd.s32 %s17, 1
      %s25 = ssub.s32 %s17, %s24
      %p26 = scmp.eq.s32.totalorder %s25, 0
      %s28 = sadd.s32 %s27, 1
      %s29 = scalar_select %p26, %s27, %s28
      %p32 = pneg %p26
      %p33 = scmp.eq.s32.totalorder %s17, 1
      %p34 = por %p32, %p33
      %p35 = scmp.ne.s32.totalorder %s27, %s30
      %p36 = scmp.eq.s32.totalorder %s17, 0
      %p37 = por %p35, %p36
      %p38 = scmp.ne.s32.totalorder %s27, %s30
      %p39 = scmp.eq.s32.totalorder %s22, 1
      %p40 = por %p38, %p39
      %p41 = scmp.ne.s32.totalorder %s30, %s31
      %p42 = scmp.eq.s32.totalorder %s22, 0
      %p43 = por %p41, %p42
      %p44 = scmp.ne.s32.totalorder %s30, %s31
      %p45 = scmp.eq.s32.totalorder %s23, 1
      %p46 = por %p44, %p45
      %p48 = scmp.ne.s32.totalorder %s31, %s47
      %p49 = scmp.eq.s32.totalorder %s23, 0
      %p50 = por %p48, %p49
      %s51 = ssub.s32 %s17, %s24
      %p52 = scmp.eq.s32.totalorder %s51, 0
      %s54 = sadd.s32 %s53, 1
      %s55 = scalar_select %p52, %s53, %s54
      %p58 = pneg %p52
      %p59 = scmp.eq.s32.totalorder %s17, 1
      %p60 = por %p58, %p59
      %p61 = scmp.ne.s32.totalorder %s53, %s56
      %p62 = scmp.eq.s32.totalorder %s17, 0
      %p63 = por %p61, %p62
      %p64 = scmp.ne.s32.totalorder %s53, %s56
      %p65 = scmp.eq.s32.totalorder %s22, 1
      %p66 = por %p64, %p65
      %p67 = scmp.ne.s32.totalorder %s56, %s57
      %p68 = scmp.eq.s32.totalorder %s22, 0
      %p69 = por %p67, %p68
      %p70 = scmp.ne.s32.totalorder %s56, %s57
      %p71 = scmp.eq.s32.totalorder %s23, 1
      %p72 = por %p70, %p71
      %p74 = scmp.ne.s32.totalorder %s57, %s73
      %p75 = scmp.eq.s32.totalorder %s23, 0
      %p76 = por %p74, %p75
      %s77 = ssub.s32 %s17, %s24
      %p78 = scmp.eq.s32.totalorder %s77, 0
      %s80 = sadd.s32 %s79, 1
      %s81 = scalar_select %p78, %s79, %s80
      %p84 = pneg %p78
      %p85 = scmp.eq.s32.totalorder %s17, 1
      %p86 = por %p84, %p85
      %p87 = scmp.ne.s32.totalorder %s79, %s82
      %p88 = scmp.eq.s32.totalorder %s17, 0
      %p89 = por %p87, %p88
      %p90 = scmp.ne.s32.totalorder %s79, %s82
      %p91 = scmp.eq.s32.totalorder %s22, 1
      %p92 = por %p90, %p91
      %p93 = scmp.ne.s32.totalorder %s82, %s83
      %p94 = scmp.eq.s32.totalorder %s22, 0
      %p95 = por %p93, %p94
      %p96 = scmp.ne.s32.totalorder %s82, %s83
      %p97 = scmp.eq.s32.totalorder %s23, 1
      %p98 = por %p96, %p97
      %p100 = scmp.ne.s32.totalorder %s83, %s99
      %p101 = scmp.eq.s32.totalorder %s23, 0
      %p102 = por %p100, %p101
      %p103 = scmp.le.s32.totalorder 1, %s17
      %p104 = scmp.lt.s32.totalorder %s17, 3
      %p105 = pnand %p103, %p104
      %p106 = pneg %p105
      // Predicated region
      $region9: #{tpu_custom_call.1} parent=5 // pred_check
        _
      $region10: #{tpu_custom_call.1} parent=5 // pred_check_branch
        %108 = sbr.rel (%p105) target = $region12
      $region11: #{tpu_custom_call.1} parent=5 // pred_region
        %s109 = ssub.s32 %s17, 1
      $region12: #{tpu_custom_call.1} parent=5 // pred_fallthru
        _
      %p110 = scmp.lt.s32.totalorder %s17, 2
      // Predicated region
      $region13: #{tpu_custom_call.1} parent=5 // pred_check
        %p111 = pneg %p110
      $region14: #{tpu_custom_call.1} parent=5 // pred_check_branch
        %113 = sbr.rel (%p111) target = $region16
      $region15: #{tpu_custom_call.1} parent=5 // pred_region
        // Predicated region
        $region17: #{tpu_custom_call.1} parent=15 // pred_check
          %p114 = pneg %p37
        $region18: #{tpu_custom_call.1} parent=15 // pred_check_branch
          %116 = sbr.rel (%p114) target = $region20
        $region19: #{tpu_custom_call.1} parent=15 // pred_region
          %s117 = sand.u32 %s27, 1
          %s118 = scalar_lea.sflag [#allocation3], %s117
          %s119 = sand.u32 %s27, 1
          %s120 = smul.addr %s119, 8
          %s121 = scalar_lea.vmem [#allocation2], %s120
          %s123 = ssub.s32 128, 128
          %124 = vsyncadd %s118, %s123
          %s125 = smul.addr %s17, 128
          %s126 = scalar_lea.hbm %s0, %s125
          %s128 = sshll.u32 %s121, 4
          %s129 = int_to_ptr.vmem [resolvable:$true] %s128
          %131 = dma.hbm_to_vmem [thread:$0]  %s126, 128, %s129, %s118
        $region20: #{tpu_custom_call.1} parent=15 // pred_fallthru
          _
        // Predicated region
        $region21: #{tpu_custom_call.1} parent=15 // pred_check
          %p132 = pneg %p63
        $region22: #{tpu_custom_call.1} parent=15 // pred_check_branch
          %134 = sbr.rel (%p132) target = $region24
        $region23: #{tpu_custom_call.1} parent=15 // pred_region
          %s135 = sand.u32 %s53, 1
          %s136 = scalar_lea.sflag [#allocation6], %s135
          %s137 = sand.u32 %s53, 1
          %s138 = smul.addr %s137, 8
          %s139 = scalar_lea.vmem [#allocation5], %s138
          %s141 = ssub.s32 128, 128
          %142 = vsyncadd %s136, %s141
          %s143 = smul.addr %s17, 128
          %s144 = scalar_lea.hbm %s1, %s143
          %s146 = sshll.u32 %s139, 4
          %s147 = int_to_ptr.vmem [resolvable:$true] %s146
          %149 = dma.hbm_to_vmem [thread:$0]  %s144, 128, %s147, %s136
        $region24: #{tpu_custom_call.1} parent=15 // pred_fallthru
          _
      $region16: #{tpu_custom_call.1} parent=5 // pred_fallthru
        _
      %p150 = scmp.le.s32.totalorder 1, %s17
      %p151 = scmp.lt.s32.totalorder %s17, 3
      %p152 = pnand %p150, %p151
      %p153 = pneg %p152
      // Predicated region
      $region25: #{tpu_custom_call.1} parent=5 // pred_check
        _
      $region26: #{tpu_custom_call.1} parent=5 // pred_check_branch
        %155 = sbr.rel (%p152) target = $region28
      $region27: #{tpu_custom_call.1} parent=5 // pred_region
        %s156 = ssub.s32 %s17, 1
        %s157 = sand.u32 %s30, 1
        %s158 = scalar_lea.sflag [#allocation3], %s157
        %s159 = sand.u32 %s30, 1
        %s160 = smul.addr %s159, 8
        %s161 = scalar_lea.vmem [#allocation2], %s160
        // Predicated region
        $region29: #{tpu_custom_call.1} parent=27 // pred_check
          %p162 = pneg %p43
        $region30: #{tpu_custom_call.1} parent=27 // pred_check_branch
          %164 = sbr.rel (%p162) target = $region32
        $region31: #{tpu_custom_call.1} parent=27 // pred_region
          %165 = dma.done %s158, 128
        $region32: #{tpu_custom_call.1} parent=27 // pred_fallthru
          _
        %s166 = sand.u32 %s56, 1
        %s167 = scalar_lea.sflag [#allocation6], %s166
        %s168 = sand.u32 %s56, 1
        %s169 = smul.addr %s168, 8
        %s170 = scalar_lea.vmem [#allocation5], %s169
        // Predicated region
        $region33: #{tpu_custom_call.1} parent=27 // pred_check
          %p171 = pneg %p69
        $region34: #{tpu_custom_call.1} parent=27 // pred_check_branch
          %173 = sbr.rel (%p171) target = $region36
        $region35: #{tpu_custom_call.1} parent=27 // pred_region
          %174 = dma.done %s167, 128
        $region36: #{tpu_custom_call.1} parent=27 // pred_fallthru
          _
        %s175 = sand.u32 %s30, 1
        %s176 = scalar_lea.sflag [#allocation3], %s175
        %s177 = sand.u32 %s30, 1
        %s178 = smul.addr %s177, 8
        %s179 = scalar_lea.vmem [#allocation2], %s178
        %p180 = pneg %p43
        %p181 = pneg %p40
        %s182 = sand.u32 %s56, 1
        %s183 = scalar_lea.sflag [#allocation6], %s182
        %s184 = sand.u32 %s56, 1
        %s185 = smul.addr %s184, 8
        %s186 = scalar_lea.vmem [#allocation5], %s185
        %p187 = pneg %p69
        %p188 = pneg %p66
        %p189 = pneg %p95
        %p190 = pneg %p92
        %s191 = sand.u32 %s82, 1
        %s192 = scalar_lea.sflag [#allocation4], %s191
        %s193 = sand.u32 %s82, 1
        %s194 = smul.addr %s193, 8
        %s195 = scalar_lea.vmem [#allocation7], %s194
        %v196 = vld [vmem:[%s161] sm:$0xff]
        %v197 = vld [vmem:[%s170] sm:$0xff]
        %198 = vmax.xlane.f32.xlu0 %v196
        %v199 = vpop.xlane.xlu0 %198
        %v200 = vsub.f32 %v196, %v199
        %v201 = vmul.f32 %v200, 1.442695
        %v202 = vpow.pop %v201
        %203 = vadd.xlane.f32.xlu0 %v202
        %v204 = vpop.xlane.xlu0 %203
        %v205 = vlog2.pop %v204
        %v206 = vmul.f32 %v205, 0.6931472
        %v207 = vadd.f32 %v199, %v206
        %208 = vadd.xlane.f32.xlu0 %v197
        %v209 = vpop.xlane.xlu0 %208
        %v210 = vmul.f32 %v197, %v196
        %211 = vadd.xlane.f32.xlu0 %v210
        %v212 = vpop.xlane.xlu0 %211
        %v213 = vmul.f32 %v207, %v209
        %v214 = vsub.f32 %v213, %v212
        %vm215 = vcmask 7168
        %v216 = vsel %vm215, %v214, 0.0
        %217 = vadd.xlane.f32.xlu0 %v216
        %v218 = vpop.xlane.xlu0 %217
        %v219 = vrot.slane %v218, 4
        %v220 = vadd.f32 %v218, %v219
        %v221 = vrot.slane %v220, 2
        %v222 = vadd.f32 %v220, %v221
        %v223 = vrot.slane %v222, 1
        %v224 = vadd.f32 %v222, %v223
        %s225 = vtos %v224
        %v226 = vstv %s225
        %v227 = vadd.f32 %v226, 0.0
        %228 = vst [vmem:[%s195] sm:$0xff] %v227
        %s229 = sand.u32 %s82, 1
        %s230 = scalar_lea.sflag [#allocation4], %s229
        %s231 = sand.u32 %s82, 1
        %s232 = smul.addr %s231, 8
        %s233 = scalar_lea.vmem [#allocation7], %s232
        // Predicated region
        $region37: #{tpu_custom_call.1} parent=27 // pred_check
          %p234 = pneg %p92
        $region38: #{tpu_custom_call.1} parent=27 // pred_check_branch
          %236 = sbr.rel (%p234) target = $region40
        $region39: #{tpu_custom_call.1} parent=27 // pred_region
          %s238 = ssub.s32 128, 128
          %239 = vsyncadd %s230, %s238
          %s240 = smul.addr %s22, 128
          %s241 = scalar_lea.hbm %s2, %s240
          %s243 = sshll.u32 %s233, 4
          %s244 = int_to_ptr.vmem [resolvable:$true] %s243
          %246 = dma.vmem_to_hbm [thread:$0]  %s244, 128, %s241, %s230
        $region40: #{tpu_custom_call.1} parent=27 // pred_fallthru
          _
      $region28: #{tpu_custom_call.1} parent=5 // pred_fallthru
        _
      %p247 = scmp.le.s32.totalorder 2, %s17
      // Predicated region
      $region41: #{tpu_custom_call.1} parent=5 // pred_check
        %p248 = pneg %p247
      $region42: #{tpu_custom_call.1} parent=5 // pred_check_branch
        %250 = sbr.rel (%p248) target = $region44
      $region43: #{tpu_custom_call.1} parent=5 // pred_region
        %s251 = ssub.s32 %s17, 2
        // Predicated region
        $region45: #{tpu_custom_call.1} parent=43 // pred_check
          %p252 = pneg %p98
        $region46: #{tpu_custom_call.1} parent=43 // pred_check_branch
          %254 = sbr.rel (%p252) target = $region48
        $region47: #{tpu_custom_call.1} parent=43 // pred_region
          %s255 = sand.u32 %s83, 1
          %s256 = scalar_lea.sflag [#allocation4], %s255
          %s257 = sand.u32 %s83, 1
          %s258 = smul.addr %s257, 8
          %s259 = scalar_lea.vmem [#allocation7], %s258
          %260 = dma.done %s256, 128
        $region48: #{tpu_custom_call.1} parent=43 // pred_fallthru
          _
      $region44: #{tpu_custom_call.1} parent=5 // pred_fallthru
        _
    $region6: #{tpu_custom_call.1} parent=1 // loop_footer
      %s21 = sadd.s32 1, %s17
    $region7: #{tpu_custom_call.1} parent=1 // loop_footer_branch
      %16 = sbr.rel target = $region3
    $region8: #{tpu_custom_call.1} parent=1 // loop_exit
      _
    %261 = vsyncpa [#allocation3], 1
    %s262 = scalar_lea.sflag [#allocation3], 1
    %263 = vsyncpa %s262, 1
    %264 = vsyncpa [#allocation6], 1
    %s265 = scalar_lea.sflag [#allocation6], 1
    %266 = vsyncpa %s265, 1
    %267 = vsyncpa [#allocation4], 1
    %s268 = scalar_lea.sflag [#allocation4], 1
    %269 = vsyncpa %s268, 1

</llo_original>
